<compile_context>
chip_gen: v5e
topology: v5e:2x2
jax: 0.10.0
libtpu: 0.0.40
codegen_flags: <defaults>
</compile_context>

<pallas_src>
import functools

import jax
import jax.numpy as jnp
from jax import lax
from jax.experimental import pallas as pl
from jax.experimental.pallas import tpu as pltpu


_TARGET_BLOCK_BYTES = 8 * 1024 * 1024  # combined (inputs + targets) bytes / step


def _round_up(x, m):
    return ((x + m - 1) // m) * m


def _sublane_multiple(dtype):
    itemsize = jnp.dtype(dtype).itemsize
    if itemsize >= 4:
        return 8
    if itemsize == 2:
        return 16
    return 32


def _pick_tiles(n, c, sub, bytes_per_elem):
    """Roofline-friendly (tile_n, tile_c) respecting sublane/lane alignment."""
    # Lane (C) tiling only when even a minimum-height block would blow the
    # per-step byte budget (tiny N and/or extremely wide C) -- protects v7x's
    # 64 MiB physical VMEM.
    min_rows = max(1, min(n, sub))
    if c > 128 and min_rows * c * bytes_per_elem > _TARGET_BLOCK_BYTES:
        tile_c = max(128, (_TARGET_BLOCK_BYTES // (min_rows * bytes_per_elem)) // 128 * 128)
        tile_c = min(tile_c, c)
    else:
        tile_c = c

    if n <= sub:
        tile_n = n  # block row dim equals the full batch dim -> always legal
    else:
        rows_budget = max(sub, _TARGET_BLOCK_BYTES // max(1, tile_c * bytes_per_elem))
        tile_n = min(8192, rows_budget, _round_up(n, sub))
        # Keep >= 2 row tiles so the parallel grid shards across both v7x TCs.
        tile_n = min(tile_n, _round_up(pl.cdiv(n, 2), sub))
        tile_n = max(sub, (tile_n // sub) * sub)
    return int(tile_n), int(tile_c)


def _mse_partial_kernel(x_ref, t_ref, out_ref, *, tile_n, tile_c, n_rows, n_cols):
    """One (tile_n, tile_c) block -> fused (1, 2, tile_c) f32 partial sums."""
    x = x_ref[...]
    t = t_ref[...]

    # Shared squared term: when t == 0 (neg case) (x - t)^2 == x^2 exactly, so
    # selecting from the same `sq` is bit-identical to the PyTorch reference.
    # Compares + subtract stay in the input dtype; single cast of the diff.
    diff = (x - t).astype(jnp.float32)
    sq = diff * diff
    pos_sq = jnp.where(t == 1.0, sq, 0.0)
    neg_sq = jnp.where(t == 0.0, sq, 0.0)

    if n_rows % tile_n != 0:
        # Last row tile is partial: rows >= n_rows are padding.
        row = pl.program_id(0) * tile_n + lax.broadcasted_iota(
            jnp.int32, (tile_n, 1), 0
        )
        valid_r = row < n_rows
        pos_sq = jnp.where(valid_r, pos_sq, 0.0)
        neg_sq = jnp.where(valid_r, neg_sq, 0.0)

    if n_cols % tile_c != 0:
        # Last lane tile is partial: lanes >= n_cols are padding.
        col = pl.program_id(1) * tile_c + lax.broadcasted_iota(
            jnp.int32, (1, tile_c), 1
        )
        valid_c = col < n_cols
        pos_sq = jnp.where(valid_c, pos_sq, 0.0)
        neg_sq = jnp.where(valid_c, neg_sq, 0.0)

    # Sublane (axis-0) reduce only (free filler under the memory-bound regime);
    # the cross-lane reduce + 1/N are done in the wrapper.  Fused output block:
    # one output DMA per grid step.
    out_ref[0, 0:1, :] = jnp.sum(pos_sq, axis=0, keepdims=True)
    out_ref[0, 1:2, :] = jnp.sum(neg_sq, axis=0, keepdims=True)


def mse_loss(inputs, targets, *, reduction="mean", tile_n=None, tile_c=None):
    """Pallas implementation of MSELoss.forward (reduction='mean').

    inputs, targets: (N, C) arrays (targets may be a narrower dtype, e.g. bf16,
    since the labels 0.0 / 0.5 / 1.0 are exact in bf16).
    Returns (pos_loss, neg_loss) as float32 scalars.
    """
    assert inputs.shape == targets.shape
    n, c = inputs.shape
    if reduction != "mean":
        # TODO(synk): reduction='none' (elementwise pass-through outputs) not wired up.
        raise NotImplementedError("only reduction='mean' is implemented")

    itemsize_x = jnp.dtype(inputs.dtype).itemsize
    itemsize_t = jnp.dtype(targets.dtype).itemsize
    bytes_per_elem = itemsize_x + itemsize_t
    sub = max(_sublane_multiple(inputs.dtype), _sublane_multiple(targets.dtype))

    auto_n, auto_c = _pick_tiles(n, c, sub, bytes_per_elem)
    tile_n = auto_n if tile_n is None else int(tile_n)
    tile_c = auto_c if tile_c is None else int(tile_c)
    assert tile_n == n or tile_n % sub == 0, "tile_n must be sublane-aligned or == N"
    assert tile_c == c or tile_c % 128 == 0, "tile_c must be lane-aligned or == C"

    num_row_tiles = int(pl.cdiv(n, tile_n))
    num_col_tiles = int(pl.cdiv(c, tile_c))

    kernel = functools.partial(
        _mse_partial_kernel, tile_n=tile_n, tile_c=tile_c, n_rows=n, n_cols=c
    )

    # 2 input streams x 2 pipeline buffers x block (+ tiny output buffers).
    # Cap at 48 MiB so v7x (64 MiB physical VMEM) keeps Mosaic scratch headroom
    # while still raising v5e's 16 MiB scoped default.
    block_in_bytes = tile_n * tile_c * bytes_per_elem
    vmem_limit = int(min(48 * 1024 * 1024, max(32 * 1024 * 1024, 3 * block_in_bytes)))

    partials = pl.pallas_call(
        kernel,
        out_shape=jax.ShapeDtypeStruct((num_row_tiles, 2, c), jnp.float32),
        grid_spec=pltpu.PrefetchScalarGridSpec(
            num_scalar_prefetch=0,
            grid=(num_row_tiles, num_col_tiles),
            in_specs=[
                pl.BlockSpec((tile_n, tile_c), lambda i, j: (i, j)),
                pl.BlockSpec((tile_n, tile_c), lambda i, j: (i, j)),
            ],
            out_specs=pl.BlockSpec((1, 2, tile_c), lambda i, j: (i, 0, j)),
        ),
        compiler_params=pltpu.CompilerParams(
            dimension_semantics=("parallel", "parallel"),
            vmem_limit_bytes=vmem_limit,
        ),
    )(inputs, targets)

    inv_n = jnp.float32(1.0 / n)
    pos_loss = jnp.sum(partials[:, 0, :]) * inv_n
    neg_loss = jnp.sum(partials[:, 1, :]) * inv_n
    return pos_loss, neg_loss


def _mse_loss_ref(inputs, targets):
    x = inputs.astype(jnp.float32)
    t = targets.astype(jnp.float32)
    pos_id = (t == 1.0).astype(jnp.float32)
    neg_id = (t == 0.0).astype(jnp.float32)
    pos = jnp.mean(jnp.sum(pos_id * (x - t) ** 2, axis=1))
    neg = jnp.mean(jnp.sum(neg_id * x * x, axis=1))
    return pos, neg


if __name__ == "__main__":
    key = jax.random.PRNGKey(0)
    k1, k2, k3, k4, k5, k6 = jax.random.split(key, 6)
    labels = jnp.array([0.0, 0.5, 1.0], dtype=jnp.float32)

    # Case 1: small, evenly tiled; auto tiling still yields >=2 row tiles
    # (v7x megacore path).
    N1, C1 = 64, 128
    x1 = jax.random.normal(k1, (N1, C1), dtype=jnp.float32)
    t1 = jax.random.choice(k2, labels, shape=(N1, C1))
    p1, q1 = mse_loss(x1, t1)
    jax.block_until_ready((p1, q1))
    pr1, qr1 = _mse_loss_ref(x1, t1)
    assert jnp.allclose(p1, pr1, rtol=1e-5, atol=1e-5), (p1, pr1)
    assert jnp.allclose(q1, qr1, rtol=1e-5, atol=1e-5), (q1, qr1)

    # Case 2: ragged batch AND C not a multiple of 128 -- exercises the
    # last-row-tile mask and the padded-lane path (no garbage lanes may leak).
    N2, C2 = 200, 100
    x2 = jax.random.normal(k3, (N2, C2), dtype=jnp.float32)
    t2 = jax.random.choice(k4, labels, shape=(N2, C2))
    p2, q2 = mse_loss(x2, t2, tile_n=64)
    jax.block_until_ready((p2, q2))
    pr2, qr2 = _mse_loss_ref(x2, t2)
    assert jnp.allclose(p2, pr2, rtol=1e-5, atol=1e-5), (p2, pr2)
    assert jnp.allclose(q2, qr2, rtol=1e-5, atol=1e-5), (q2, qr2)

    # Case 3: forced lane (C) tiling with a partial last column tile --
    # exercises the wide-C / small-N hardening path at a small shape.
    N3, C3 = 16, 300
    x3 = jax.random.normal(k5, (N3, C3), dtype=jnp.float32)
    t3 = jax.random.choice(k6, labels, shape=(N3, C3))
    p3, q3 = mse_loss(x3, t3, tile_c=128)
    jax.block_until_ready((p3, q3))
    pr3, qr3 = _mse_loss_ref(x3, t3)
    assert jnp.allclose(p3, pr3, rtol=1e-5, atol=1e-5), (p3, pr3)
    assert jnp.allclose(q3, qr3, rtol=1e-5, atol=1e-5), (q3, qr3)

    print("KERNEL_OK")
</pallas_src>

<mosaic_0001>
module attributes {stable_mosaic.version = 11 : i64} {
  func.func @_mse_partial_kernel(%arg0: i32, %arg1: i32, %arg2: memref<32x128xf32, #tpu.memory_space<vmem>>, %arg3: memref<32x128xf32, #tpu.memory_space<vmem>>, %arg4: memref<1x2x128xf32, #tpu.memory_space<vmem>>) attributes {dimension_semantics = [#tpu.dimension_semantics<parallel>, #tpu.dimension_semantics<parallel>], iteration_bounds = array<i64: 2, 1>, scalar_prefetch = 0 : i64, scratch_operands = 0 : i64, tpu.core_type = #tpu.core_type<tc>, window_params = [{transform_indices = @transform_0, window_bounds = array<i64: 32, 128>}, {transform_indices = @transform_1, window_bounds = array<i64: 32, 128>}, {transform_indices = @transform_2, window_bounds = array<i64: 1, 2, 128>}]} {
    %c0 = arith.constant 0 : index
    %c0_0 = arith.constant 0 : index
    %0 = vector.load %arg2[%c0, %c0_0] : memref<32x128xf32, #tpu.memory_space<vmem>>, vector<32x128xf32>
    %c0_1 = arith.constant 0 : index
    %c0_2 = arith.constant 0 : index
    %1 = vector.load %arg3[%c0_1, %c0_2] : memref<32x128xf32, #tpu.memory_space<vmem>>, vector<32x128xf32>
    %2 = arith.subf %0, %1 : vector<32x128xf32>
    %3 = arith.mulf %2, %2 : vector<32x128xf32>
    %cst = arith.constant 1.000000e+00 : f32
    %4 = vector.broadcast %cst : f32 to vector<32x128xf32>
    %5 = arith.cmpf oeq, %1, %4 : vector<32x128xf32>
    %cst_3 = arith.constant 0.000000e+00 : f32
    %6 = vector.broadcast %cst_3 : f32 to vector<32x128xf32>
    %7 = arith.select %5, %3, %6 : vector<32x128xi1>, vector<32x128xf32>
    %cst_4 = arith.constant 0.000000e+00 : f32
    %8 = vector.broadcast %cst_4 : f32 to vector<32x128xf32>
    %9 = arith.cmpf oeq, %1, %8 : vector<32x128xf32>
    %cst_5 = arith.constant 0.000000e+00 : f32
    %10 = vector.broadcast %cst_5 : f32 to vector<32x128xf32>
    %11 = arith.select %9, %3, %10 : vector<32x128xi1>, vector<32x128xf32>
    %cst_6 = arith.constant dense<0.000000e+00> : vector<128xf32>
    %12 = vector.multi_reduction <add>, %7, %cst_6 [0] : vector<32x128xf32> to vector<128xf32>
    %13 = vector.shape_cast %12 : vector<128xf32> to vector<1x128xf32>
    %c0_7 = arith.constant 0 : index
    %c0_8 = arith.constant 0 : index
    %c0_9 = arith.constant 0 : index
    %14 = vector.load %arg4[%c0_7, %c0_8, %c0_9] : memref<1x2x128xf32, #tpu.memory_space<vmem>>, vector<1x1x128xf32>
    %15 = vector.shape_cast %14 : vector<1x1x128xf32> to vector<1x128xf32>
    %16 = vector.shape_cast %13 : vector<1x128xf32> to vector<1x1x128xf32>
    tpu.vector_store %arg4[%c0_7, %c0_8, %c0_9], %16 {strides = array<i32>} : memref<1x2x128xf32, #tpu.memory_space<vmem>>, vector<1x1x128xf32>,
    %cst_10 = arith.constant dense<0.000000e+00> : vector<128xf32>
    %17 = vector.multi_reduction <add>, %11, %cst_10 [0] : vector<32x128xf32> to vector<128xf32>
    %18 = vector.shape_cast %17 : vector<128xf32> to vector<1x128xf32>
    %c0_11 = arith.constant 0 : index
    %c1 = arith.constant 1 : index
    %c0_12 = arith.constant 0 : index
    %19 = vector.load %arg4[%c0_11, %c1, %c0_12] : memref<1x2x128xf32, #tpu.memory_space<vmem>>, vector<1x1x128xf32>
    %20 = vector.shape_cast %19 : vector<1x1x128xf32> to vector<1x128xf32>
    %21 = vector.shape_cast %18 : vector<1x128xf32> to vector<1x1x128xf32>
    tpu.vector_store %arg4[%c0_11, %c1, %c0_12], %21 {strides = array<i32>} : memref<1x2x128xf32, #tpu.memory_space<vmem>>, vector<1x1x128xf32>,
    return
  }
  func.func @transform_0(%arg0: i32, %arg1: i32) -> (i32, i32) {
    %c0_i32 = arith.constant 0 : i32
    return %arg0, %arg1 : i32, i32
  }
  func.func @transform_1(%arg0: i32, %arg1: i32) -> (i32, i32) {
    %c0_i32 = arith.constant 0 : i32
    return %arg0, %arg1 : i32, i32
  }
  func.func @transform_2(%arg0: i32, %arg1: i32) -> (i32, i32, i32) {
    %c0_i32 = arith.constant 0 : i32
    %c0_i32_0 = arith.constant 0 : i32
    return %arg0, %c0_i32, %arg1 : i32, i32, i32
  }
}

</mosaic_0001>

<llo_original>
// kernel: tpu_custom_call.1
$region0: #{tpu_custom_call.1}
  #allocation0 [shape = 'u32[]', space=smem, size = 0x4, offset = 0x4, fixed_abs, tag = 'smem constant byte address 0x4 - core index']
  #allocation1 [shape = 'u32[72,128]{1,0:T(1,128)}', space=vmem, size = 0x9000, scoped, tag = 'internal scratch']
  %s0 = inlined_call_operand.hbm [shape: f32[64,128], index: 0, kind: input, shape index: {}]
  %s1 = inlined_call_operand.hbm [shape: f32[64,128], index: 1, kind: input, shape index: {}]
  %s2 = inlined_call_operand.hbm [shape: f32[2,2,128], index: 2, kind: output, shape index: {}]
  %s3 = sld [smem:[#allocation0]]
  $region49: #{tpu_custom_call.1} parent=0
    _
  %s5 = ssub.s32 1, %s3
  %s6 = scalar_select 0, %s5, %s3
  $region1: #{tpu_custom_call.1} parent=0
    #allocation2 [shape = 'u8[32768]{0}', space=vmem, size = 0x8000, scoped, tag = 'input window, operand 0']
    #allocation3 [shape = 's32[2]{0}', space=sflag, size = 0x8, scoped, tag = 'scoped memory for tpu_custom_call.1']
    #allocation4 [shape = 's32[2]{0}', space=sflag, size = 0x8, scoped, tag = 'scoped memory for tpu_custom_call.1']
    #allocation5 [shape = 'u8[32768]{0}', space=vmem, size = 0x8000, scoped, tag = 'input window, operand 1']
    #allocation6 [shape = 's32[2]{0}', space=sflag, size = 0x8, scoped, tag = 'scoped memory for tpu_custom_call.1']
    #allocation7 [shape = 'u8[2048]{0}', space=vmem, size = 0x800, scoped, tag = 'output window, operand 0']
    %7 = vsyncpa [#allocation3], 0
    %s8 = scalar_lea.sflag [#allocation3], 1
    %9 = vsyncpa %s8, 0
    %10 = vsyncpa [#allocation6], 0
    %s11 = scalar_lea.sflag [#allocation6], 1
    %12 = vsyncpa %s11, 0
    %13 = vsyncpa [#allocation4], 0
    %s14 = scalar_lea.sflag [#allocation4], 1
    %15 = vsyncpa %s14, 0
    loop: start=0, step=1, limit=4
    $region2: #{tpu_custom_call.1} parent=1 // loop_pre_header
      _
    $region3: #{tpu_custom_call.1} parent=1 // loop_header
      %s17 = sphi 0, %s21
      %p18 = scmp.ge.s32.totalorder %s17, 4
      %s24 = sphi 0, %s36
      %s25 = sphi 0, %s32
      %s26 = sphi 0, %s24
      %s27 = sphi 0, %s25
      %s28 = sphi 0, %s26
      %s29 = sphi 0, %s27
      %s41 = sphi 0, %s43
      %s44 = sphi 0, %s41
      %s45 = sphi 0, %s44
      %s61 = sphi 0, %s45
      %s69 = sphi 0, %s71
      %s72 = sphi 0, %s69
      %s73 = sphi 0, %s72
      %s89 = sphi 0, %s73
      %s97 = sphi 0, %s99
      %s100 = sphi 0, %s97
      %s101 = sphi 0, %s100
      %s117 = sphi 0, %s101
    $region4: #{tpu_custom_call.1} parent=1 // loop_header_branch
      %20 = sbr.rel (%p18) target = $region8
    $region5: #{tpu_custom_call.1} parent=1 // loop_body
      %s22 = ssub.s32 %s17, 1
      %s23 = ssub.s32 %s17, 2
      %s30 = sadd.s32 1, %s25
      %p31 = scmp.ge.s32.totalorder %s30, 1
      %s32 = scalar_select %p31, 0, %s30
      %s33 = sadd.s32 1, %s24
      %s34 = scalar_select %p31, %s33, %s24
      %p35 = scmp.ge.s32.totalorder %s34, 2
      %s36 = scalar_select %p35, 0, %s34
      %s37 = ssub.s32 %s24, %s36
      %s38 = ssub.s32 %s25, %s32
      %s39 = sor.u32 %s37, %s38
      %p40 = scmp.eq.s32.totalorder %s39, 0
      %s42 = sadd.s32 %s41, 1
      %s43 = scalar_select %p40, %s41, %s42
      %p46 = pneg %p40
      %p47 = scmp.eq.s32.totalorder %s17, 1
      %p48 = por %p46, %p47
      %p49 = scmp.ne.s32.totalorder %s41, %s44
      %p50 = scmp.eq.s32.totalorder %s17, 0
      %p51 = por %p49, %p50
      %p52 = scmp.ne.s32.totalorder %s41, %s44
      %p53 = scmp.eq.s32.totalorder %s22, 1
      %p54 = por %p52, %p53
      %p55 = scmp.ne.s32.totalorder %s44, %s45
      %p56 = scmp.eq.s32.totalorder %s22, 0
      %p57 = por %p55, %p56
      %p58 = scmp.ne.s32.totalorder %s44, %s45
      %p59 = scmp.eq.s32.totalorder %s23, 1
      %p60 = por %p58, %p59
      %p62 = scmp.ne.s32.totalorder %s45, %s61
      %p63 = scmp.eq.s32.totalorder %s23, 0
      %p64 = por %p62, %p63
      %s65 = ssub.s32 %s24, %s36
      %s66 = ssub.s32 %s25, %s32
      %s67 = sor.u32 %s65, %s66
      %p68 = scmp.eq.s32.totalorder %s67, 0
      %s70 = sadd.s32 %s69, 1
      %s71 = scalar_select %p68, %s69, %s70
      %p74 = pneg %p68
      %p75 = scmp.eq.s32.totalorder %s17, 1
      %p76 = por %p74, %p75
      %p77 = scmp.ne.s32.totalorder %s69, %s72
      %p78 = scmp.eq.s32.totalorder %s17, 0
      %p79 = por %p77, %p78
      %p80 = scmp.ne.s32.totalorder %s69, %s72
      %p81 = scmp.eq.s32.totalorder %s22, 1
      %p82 = por %p80, %p81
      %p83 = scmp.ne.s32.totalorder %s72, %s73
      %p84 = scmp.eq.s32.totalorder %s22, 0
      %p85 = por %p83, %p84
      %p86 = scmp.ne.s32.totalorder %s72, %s73
      %p87 = scmp.eq.s32.totalorder %s23, 1
      %p88 = por %p86, %p87
      %p90 = scmp.ne.s32.totalorder %s73, %s89
      %p91 = scmp.eq.s32.totalorder %s23, 0
      %p92 = por %p90, %p91
      %s93 = ssub.s32 %s24, %s36
      %s94 = ssub.s32 %s25, %s32
      %s95 = sor.u32 %s93, %s94
      %p96 = scmp.eq.s32.totalorder %s95, 0
      %s98 = sadd.s32 %s97, 1
      %s99 = scalar_select %p96, %s97, %s98
      %p102 = pneg %p96
      %p103 = scmp.eq.s32.totalorder %s17, 1
      %p104 = por %p102, %p103
      %p105 = scmp.ne.s32.totalorder %s97, %s100
      %p106 = scmp.eq.s32.totalorder %s17, 0
      %p107 = por %p105, %p106
      %p108 = scmp.ne.s32.totalorder %s97, %s100
      %p109 = scmp.eq.s32.totalorder %s22, 1
      %p110 = por %p108, %p109
      %p111 = scmp.ne.s32.totalorder %s100, %s101
      %p112 = scmp.eq.s32.totalorder %s22, 0
      %p113 = por %p111, %p112
      %p114 = scmp.ne.s32.totalorder %s100, %s101
      %p115 = scmp.eq.s32.totalorder %s23, 1
      %p116 = por %p114, %p115
      %p118 = scmp.ne.s32.totalorder %s101, %s117
      %p119 = scmp.eq.s32.totalorder %s23, 0
      %p120 = por %p118, %p119
      %p121 = scmp.le.s32.totalorder 1, %s17
      %p122 = scmp.lt.s32.totalorder %s17, 3
      %p123 = pnand %p121, %p122
      %p124 = pneg %p123
      // Predicated region
      $region9: #{tpu_custom_call.1} parent=5 // pred_check
        _
      $region10: #{tpu_custom_call.1} parent=5 // pred_check_branch
        %126 = sbr.rel (%p123) target = $region12
      $region11: #{tpu_custom_call.1} parent=5 // pred_region
        %s127 = ssub.s32 %s17, 1
      $region12: #{tpu_custom_call.1} parent=5 // pred_fallthru
        _
      %p128 = scmp.lt.s32.totalorder %s17, 2
      // Predicated region
      $region13: #{tpu_custom_call.1} parent=5 // pred_check
        %p129 = pneg %p128
      $region14: #{tpu_custom_call.1} parent=5 // pred_check_branch
        %131 = sbr.rel (%p129) target = $region16
      $region15: #{tpu_custom_call.1} parent=5 // pred_region
        // Predicated region
        $region17: #{tpu_custom_call.1} parent=15 // pred_check
          %p132 = pneg %p51
        $region18: #{tpu_custom_call.1} parent=15 // pred_check_branch
          %134 = sbr.rel (%p132) target = $region20
        $region19: #{tpu_custom_call.1} parent=15 // pred_region
          %s135 = sand.u32 %s41, 1
          %s136 = scalar_lea.sflag [#allocation3], %s135
          %s137 = sand.u32 %s41, 1
          %s138 = smul.addr %s137, 32
          %s139 = scalar_lea.vmem [#allocation2], %s138
          %s140 = smul.u32 4, %s24
          %142 = vsyncadd %s136, 0
          %s143 = sadd.s32 %s25, %s140
          %s144 = smul.addr %s143, 8
          %s145 = scalar_lea.hbm %s0, %s144
          %s146 = sshll.u32 %s145, 4
          %s147 = int_to_ptr.hbm [resolvable:$true] %s146
          %s148 = sshll.u32 %s139, 4
          %s149 = int_to_ptr.vmem [resolvable:$true] %s148
          %154 = dma.hbm_to_vmem [thread:$0]  %s147, 512, %s149, %s136, 128, 128, 8
        $region20: #{tpu_custom_call.1} parent=15 // pred_fallthru
          _
        // Predicated region
        $region21: #{tpu_custom_call.1} parent=15 // pred_check
          %p155 = pneg %p79
        $region22: #{tpu_custom_call.1} parent=15 // pred_check_branch
          %157 = sbr.rel (%p155) target = $region24
        $region23: #{tpu_custom_call.1} parent=15 // pred_region
          %s158 = sand.u32 %s69, 1
          %s159 = scalar_lea.sflag [#allocation6], %s158
          %s160 = sand.u32 %s69, 1
          %s161 = smul.addr %s160, 32
          %s162 = scalar_lea.vmem [#allocation5], %s161
          %s163 = smul.u32 4, %s24
          %165 = vsyncadd %s159, 0
          %s166 = sadd.s32 %s25, %s163
          %s167 = smul.addr %s166, 8
          %s168 = scalar_lea.hbm %s1, %s167
          %s169 = sshll.u32 %s168, 4
          %s170 = int_to_ptr.hbm [resolvable:$true] %s169
          %s171 = sshll.u32 %s162, 4
          %s172 = int_to_ptr.vmem [resolvable:$true] %s171
          %177 = dma.hbm_to_vmem [thread:$0]  %s170, 512, %s172, %s159, 128, 128, 8
        $region24: #{tpu_custom_call.1} parent=15 // pred_fallthru
          _
      $region16: #{tpu_custom_call.1} parent=5 // pred_fallthru
        _
      %p178 = scmp.le.s32.totalorder 1, %s17
      %p179 = scmp.lt.s32.totalorder %s17, 3
      %p180 = pnand %p178, %p179
      %p181 = pneg %p180
      // Predicated region
      $region25: #{tpu_custom_call.1} parent=5 // pred_check
        _
      $region26: #{tpu_custom_call.1} parent=5 // pred_check_branch
        %183 = sbr.rel (%p180) target = $region28
      $region27: #{tpu_custom_call.1} parent=5 // pred_region
        %s184 = ssub.s32 %s17, 1
        %s185 = sand.u32 %s44, 1
        %s186 = scalar_lea.sflag [#allocation3], %s185
        %s187 = sand.u32 %s44, 1
        %s188 = smul.addr %s187, 32
        %s189 = scalar_lea.vmem [#allocation2], %s188
        // Predicated region
        $region29: #{tpu_custom_call.1} parent=27 // pred_check
          %p190 = pneg %p57
        $region30: #{tpu_custom_call.1} parent=27 // pred_check_branch
          %192 = sbr.rel (%p190) target = $region32
        $region31: #{tpu_custom_call.1} parent=27 // pred_region
          %194 = dma.done %s186, 512
        $region32: #{tpu_custom_call.1} parent=27 // pred_fallthru
          _
        %s195 = sand.u32 %s72, 1
        %s196 = scalar_lea.sflag [#allocation6], %s195
        %s197 = sand.u32 %s72, 1
        %s198 = smul.addr %s197, 32
        %s199 = scalar_lea.vmem [#allocation5], %s198
        // Predicated region
        $region33: #{tpu_custom_call.1} parent=27 // pred_check
          %p200 = pneg %p85
        $region34: #{tpu_custom_call.1} parent=27 // pred_check_branch
          %202 = sbr.rel (%p200) target = $region36
        $region35: #{tpu_custom_call.1} parent=27 // pred_region
          %204 = dma.done %s196, 512
        $region36: #{tpu_custom_call.1} parent=27 // pred_fallthru
          _
        %s205 = sand.u32 %s44, 1
        %s206 = scalar_lea.sflag [#allocation3], %s205
        %s207 = sand.u32 %s44, 1
        %s208 = smul.addr %s207, 32
        %s209 = scalar_lea.vmem [#allocation2], %s208
        %p210 = pneg %p57
        %p211 = pneg %p54
        %s212 = sand.u32 %s72, 1
        %s213 = scalar_lea.sflag [#allocation6], %s212
        %s214 = sand.u32 %s72, 1
        %s215 = smul.addr %s214, 32
        %s216 = scalar_lea.vmem [#allocation5], %s215
        %p217 = pneg %p85
        %p218 = pneg %p82
        %p219 = pneg %p113
        %p220 = pneg %p110
        %s221 = sand.u32 %s100, 1
        %s222 = scalar_lea.sflag [#allocation4], %s221
        %s223 = sand.u32 %s100, 1
        %s224 = smul.addr %s223, 2
        %s225 = scalar_lea.vmem [#allocation7], %s224
        %s226 = smul.u32 4, %s26
        %s227 = smul.u32 4, %s26
        %v228 = vld [vmem:[%s189] sm:$0xff]
        %v229 = vld [vmem:[%s189 + $0x8] sm:$0xff]
        %v230 = vld [vmem:[%s189 + $0x10] sm:$0xff]
        %v231 = vld [vmem:[%s189 + $0x18] sm:$0xff]
        %v232 = vld [vmem:[%s199] sm:$0xff]
        %v233 = vld [vmem:[%s199 + $0x8] sm:$0xff]
        %v234 = vld [vmem:[%s199 + $0x10] sm:$0xff]
        %v235 = vld [vmem:[%s199 + $0x18] sm:$0xff]
        %v236 = vsub.f32 %v228, %v232
        %v237 = vsub.f32 %v229, %v233
        %v238 = vsub.f32 %v230, %v234
        %v239 = vsub.f32 %v231, %v235
        %v240 = vmul.f32 %v236, %v236
        %v241 = vmul.f32 %v237, %v237
        %v242 = vmul.f32 %v238, %v238
        %v243 = vmul.f32 %v239, %v239
        %vm244 = vcmp.eq.f32.partialorder %v232, 1.0
        %vm245 = vcmp.eq.f32.partialorder %v233, 1.0
        %vm246 = vcmp.eq.f32.partialorder %v234, 1.0
        %vm247 = vcmp.eq.f32.partialorder %v235, 1.0
        %v248 = vsel %vm244, %v240, 0.0
        %v249 = vsel %vm245, %v241, 0.0
        %v250 = vsel %vm246, %v242, 0.0
        %v251 = vsel %vm247, %v243, 0.0
        %vm252 = vcmp.eq.f32.partialorder %v232, 0.0
        %vm253 = vcmp.eq.f32.partialorder %v233, 0.0
        %vm254 = vcmp.eq.f32.partialorder %v234, 0.0
        %vm255 = vcmp.eq.f32.partialorder %v235, 0.0
        %v256 = vsel %vm252, %v240, 0.0
        %v257 = vsel %vm253, %v241, 0.0
        %v258 = vsel %vm254, %v242, 0.0
        %v259 = vsel %vm255, %v243, 0.0
        %v260 = vadd.f32 %v248, %v249
        %v261 = vadd.f32 %v260, %v250
        %v262 = vadd.f32 %v261, %v251
        %v263 = vrot.slane %v262, 4
        %v264 = vadd.f32 %v262, %v263
        %v265 = vrot.slane %v264, 2
        %v266 = vadd.f32 %v264, %v265
        %v267 = vrot.slane %v266, 1
        %v268 = vadd.f32 %v266, %v267
        %269 = vst [vmem:[%s225] sm:$0x1] %v268
        %v270 = vadd.f32 %v256, %v257
        %v271 = vadd.f32 %v270, %v258
        %v272 = vadd.f32 %v271, %v259
        %v273 = vrot.slane %v272, 4
        %v274 = vadd.f32 %v272, %v273
        %v275 = vrot.slane %v274, 2
        %v276 = vadd.f32 %v274, %v275
        %v277 = vrot.slane %v276, 1
        %v278 = vadd.f32 %v276, %v277
        %279 = vst [vmem:[%s225 + $0x1] sm:$0x1] %v278
        %s280 = sand.u32 %s100, 1
        %s281 = scalar_lea.sflag [#allocation4], %s280
        %s282 = sand.u32 %s100, 1
        %s283 = smul.addr %s282, 2
        %s284 = scalar_lea.vmem [#allocation7], %s283
        // Predicated region
        $region37: #{tpu_custom_call.1} parent=27 // pred_check
          %p285 = pneg %p110
        $region38: #{tpu_custom_call.1} parent=27 // pred_check_branch
          %287 = sbr.rel (%p285) target = $region40
        $region39: #{tpu_custom_call.1} parent=27 // pred_region
          %289 = vsyncadd %s281, 0
          %s290 = sadd.s32 %s27, %s26
          %s291 = smul.addr %s290, 2
          %s292 = scalar_lea.hbm %s2, %s291
          %s294 = sshll.u32 %s284, 4
          %s295 = int_to_ptr.vmem [resolvable:$true] %s294
          %s296 = sshll.u32 %s292, 4
          %s297 = int_to_ptr.hbm [resolvable:$true] %s296
          %299 = dma.vmem_to_hbm [thread:$0]  %s295, 32, %s297, %s281
        $region40: #{tpu_custom_call.1} parent=27 // pred_fallthru
          _
      $region28: #{tpu_custom_call.1} parent=5 // pred_fallthru
        _
      %p300 = scmp.le.s32.totalorder 2, %s17
      // Predicated region
      $region41: #{tpu_custom_call.1} parent=5 // pred_check
        %p301 = pneg %p300
      $region42: #{tpu_custom_call.1} parent=5 // pred_check_branch
        %303 = sbr.rel (%p301) target = $region44
      $region43: #{tpu_custom_call.1} parent=5 // pred_region
        %s304 = ssub.s32 %s17, 2
        // Predicated region
        $region45: #{tpu_custom_call.1} parent=43 // pred_check
          %p305 = pneg %p116
        $region46: #{tpu_custom_call.1} parent=43 // pred_check_branch
          %307 = sbr.rel (%p305) target = $region48
        $region47: #{tpu_custom_call.1} parent=43 // pred_region
          %s308 = sand.u32 %s101, 1
          %s309 = scalar_lea.sflag [#allocation4], %s308
          %s310 = sand.u32 %s101, 1
          %s311 = smul.addr %s310, 2
          %s312 = scalar_lea.vmem [#allocation7], %s311
          %314 = dma.done %s309, 32
        $region48: #{tpu_custom_call.1} parent=43 // pred_fallthru
          _
      $region44: #{tpu_custom_call.1} parent=5 // pred_fallthru
        _
    $region6: #{tpu_custom_call.1} parent=1 // loop_footer
      %s21 = sadd.s32 1, %s17
    $region7: #{tpu_custom_call.1} parent=1 // loop_footer_branch
      %16 = sbr.rel target = $region3
    $region8: #{tpu_custom_call.1} parent=1 // loop_exit
      _
    %315 = vsyncpa [#allocation3], 1
    %s316 = scalar_lea.sflag [#allocation3], 1
    %317 = vsyncpa %s316, 1
    %318 = vsyncpa [#allocation6], 1
    %s319 = scalar_lea.sflag [#allocation6], 1
    %320 = vsyncpa %s319, 1
    %321 = vsyncpa [#allocation4], 1
    %s322 = scalar_lea.sflag [#allocation4], 1
    %323 = vsyncpa %s322, 1

</llo_original>
